<compile_context>
chip_gen: v7x
topology: tpu7x:2x2x1
jax: 0.10.0
libtpu: 0.0.40
codegen_flags: <defaults>
</compile_context>

<pallas_src>
import functools

import jax
import jax.numpy as jnp
from jax.experimental import pallas as pl
from jax.experimental.pallas import tpu as pltpu


def _round_up(a: int, m: int) -> int:
    return (a + m - 1) // m * m


def _vmem_budget_bytes() -> int:
    """Scoped-VMEM budget: ~3/4 of per-core physical VMEM, capped at 64 MiB."""
    try:
        cap = int(pltpu.get_tpu_info().vmem_capacity_bytes)
    except Exception:
        cap = 64 * 1024 * 1024          # conservative (v7x per-core physical)
    return min(64 * 1024 * 1024, (cap * 3) // 4)


def _pick_block_b(B: int, D: int, tile_target_bytes: int) -> int:
    """Rows per batch tile. Sized in f32 bytes with lane padding (temps are f32)."""
    row_bytes = _round_up(max(D, 1), 128) * 4
    if B * row_bytes <= tile_target_bytes:
        return B                        # whole batch in a single full-extent block
    bb = max(8, min(B, tile_target_bytes // row_bytes))
    bb = max(8, (bb // 8) * 8)
    # Prefer >=16 grid steps (>=8 per TensorCore on dual-core parts) without
    # letting tiles drop below ~512 KiB (keeps the 0.35us/step overhead hidden).
    min_bb = max(8, ((512 * 1024) // row_bytes // 8) * 8)
    while bb > min_bb and pl.cdiv(B, bb) < 16:
        bb = max(min_bb, ((bb // 2) // 8) * 8)
    # Prefer an exact divisor of B (no ragged last block) if one is nearby.
    if B % bb != 0:
        for cand in range(bb, max(8, (2 * bb) // 3) - 1, -8):
            if B % cand == 0:
                return cand
    return bb


def cross_network_kernel(x_ref, wt_ref, c_ref, r_ref, o_ref, *, num_layers):
    """One batch tile of the collapsed cross network.

    x_ref : (TB, D)  input tile (kept in its own dtype for the MXU)
    wt_ref: (D, L)   stacked layer weights, transposed (bf16 iff x is bf16)
    c_ref : (1, L)   c_i = (sum_{j<i} b_j) . w_i                    (f32)
    r_ref : (1, D)   r_L = sum_j b_j                                (f32)
    o_ref : (TB, D)  output tile
    """
    x = x_ref[...]
    # One MXU matmul (native input dtype, f32 accumulate) replaces
    # `num_layers` cross-lane reductions.
    u = jnp.dot(x, wt_ref[...], preferred_element_type=jnp.float32)   # (TB, L)
    cv = c_ref[...]                                                   # (1, L)
    # Per-row scalar recurrence, statically unrolled (L is small).
    a = 1.0 + u[:, 0:1] + cv[:, 0:1]
    for i in range(1, num_layers):
        a = a * (1.0 + u[:, i:i + 1]) + cv[:, i:i + 1]
    # f32 cast only here (epilogue); no resident f32 copy of the tile.
    o_ref[...] = (x.astype(jnp.float32) * a + r_ref[...]).astype(o_ref.dtype)


def cross_network(x, w, b, *, block_b=None, vmem_budget=None):
    """x: (B, D), w: (L, D) layer weights, b: (L, D) layer biases -> (B, D)."""
    B, D = x.shape
    L = w.shape[0]
    if L == 0:
        return x
    out_dtype = x.dtype

    # Batch-independent pieces of the collapsed recurrence (tiny; done in XLA).
    wf = w.astype(jnp.float32)
    bf = b.astype(jnp.float32)
    r_prefix = jnp.concatenate(
        [jnp.zeros((1, D), jnp.float32), jnp.cumsum(bf, axis=0)[:-1]], axis=0)  # (L, D)
    c = jnp.sum(r_prefix * wf, axis=-1).reshape(1, L)                           # (1, L)
    r_last = jnp.sum(bf, axis=0, keepdims=True)                                 # (1, D)

    # MXU runs natively in bf16; keep f32 otherwise. Accumulation is f32 either way.
    mm_dtype = jnp.bfloat16 if x.dtype == jnp.bfloat16 else jnp.float32
    wt = w.astype(mm_dtype).T                                                   # (D, L)

    if vmem_budget is None:
        vmem_budget = _vmem_budget_bytes()
    tile_target = max(2 * 1024 * 1024, min(8 * 1024 * 1024, vmem_budget // 10))

    if block_b is None:
        block_b = _pick_block_b(B, D, tile_target)
    block_b = min(block_b, B)
    if block_b != B:
        block_b = max(8, (block_b // 8) * 8)   # (8,128) rule: mult-of-8 or full extent

    # Ragged last block (when block_b does not divide B) is handled by Pallas:
    # rows are independent, OOB input rows are garbage but their outputs are
    # masked on store -> no jnp.pad / out-slice HBM round trips.
    grid = (pl.cdiv(B, block_b),)

    kernel = functools.partial(cross_network_kernel, num_layers=L)

    return pl.pallas_call(
        kernel,
        out_shape=jax.ShapeDtypeStruct((B, D), out_dtype),
        grid_spec=pltpu.PrefetchScalarGridSpec(
            num_scalar_prefetch=0,
            grid=grid,
            in_specs=[
                pl.BlockSpec((block_b, D), lambda i: (i, 0)),   # x tile (pipelined)
                pl.BlockSpec((D, L), lambda i: (0, 0)),         # W^T    (resident)
                pl.BlockSpec((1, L), lambda i: (0, 0)),         # c      (resident)
                pl.BlockSpec((1, D), lambda i: (0, 0)),         # r_L    (resident)
            ],
            out_specs=pl.BlockSpec((block_b, D), lambda i: (i, 0)),
        ),
        compiler_params=pltpu.CompilerParams(
            dimension_semantics=("parallel",),
            vmem_limit_bytes=int(vmem_budget),
        ),
    )(x, wt, c, r_last)


def cross_network_ref(x, w, b):
    """Pure-JAX reference matching the PyTorch forward exactly."""
    x0 = x
    out = x
    for i in range(w.shape[0]):
        xw = out @ w[i][:, None]          # Linear(D, 1, bias=False)
        out = x0 * xw + b[i][None, :] + out
    return out


if __name__ == "__main__":
    # --- test 1: small single-block path -----------------------------------
    B, D, L = 8, 32, 3
    kx, kw, kb = jax.random.split(jax.random.PRNGKey(0), 3)
    x = jax.random.normal(kx, (B, D), dtype=jnp.float32)
    # Linear(D, 1) weights ~ U(-1/sqrt(D), 1/sqrt(D)); biases are zero at init
    # in the PyTorch module, but use small non-zero values to exercise the
    # full (bias-dependent) path of the kernel.
    bound = 1.0 / (D ** 0.5)
    w = jax.random.uniform(kw, (L, D), dtype=jnp.float32, minval=-bound, maxval=bound)
    b = 0.1 * jax.random.normal(kb, (L, D), dtype=jnp.float32)

    out = jax.block_until_ready(cross_network(x, w, b))
    ref = cross_network_ref(x, w, b)
    assert out.shape == (B, D)
    assert jnp.allclose(out, ref, atol=1e-4, rtol=1e-4), "mismatch vs reference (test 1)"

    # --- test 2: ragged batch grid (B % block_b != 0) + non-128 feature dim -
    B2, D2, L2 = 40, 96, 4
    k1, k2, k3 = jax.random.split(jax.random.PRNGKey(1), 3)
    x2 = jax.random.normal(k1, (B2, D2), dtype=jnp.float32)
    bound2 = 1.0 / (D2 ** 0.5)
    w2 = jax.random.uniform(k2, (L2, D2), dtype=jnp.float32, minval=-bound2, maxval=bound2)
    b2 = 0.1 * jax.random.normal(k3, (L2, D2), dtype=jnp.float32)

    out2 = jax.block_until_ready(cross_network(x2, w2, b2, block_b=16))
    ref2 = cross_network_ref(x2, w2, b2)
    assert out2.shape == (B2, D2)
    assert jnp.allclose(out2, ref2, atol=1e-4, rtol=1e-4), "mismatch vs reference (test 2)"

    print("KERNEL_OK")
</pallas_src>

<mosaic_0001>
module attributes {stable_mosaic.version = 11 : i64} {
  func.func @cross_network_kernel(%arg0: i32, %arg1: memref<8x32xf32, #tpu.memory_space<vmem>>, %arg2: memref<32x3xf32, #tpu.memory_space<vmem>>, %arg3: memref<1x3xf32, #tpu.memory_space<vmem>>, %arg4: memref<1x32xf32, #tpu.memory_space<vmem>>, %arg5: memref<8x32xf32, #tpu.memory_space<vmem>>) attributes {dimension_semantics = [#tpu.dimension_semantics<parallel>], iteration_bounds = array<i64: 1>, scalar_prefetch = 0 : i64, scratch_operands = 0 : i64, tpu.core_type = #tpu.core_type<tc>, window_params = [{transform_indices = @transform_0, window_bounds = array<i64: 8, 32>}, {pipeline_mode = #tpu.pipeline_mode<synchronous>, transform_indices = @transform_1, window_bounds = array<i64: 32, 3>}, {pipeline_mode = #tpu.pipeline_mode<synchronous>, transform_indices = @transform_2, window_bounds = array<i64: 1, 3>}, {pipeline_mode = #tpu.pipeline_mode<synchronous>, transform_indices = @transform_3, window_bounds = array<i64: 1, 32>}, {transform_indices = @transform_4, window_bounds = array<i64: 8, 32>}]} {
    %c0 = arith.constant 0 : index
    %c0_0 = arith.constant 0 : index
    %0 = vector.load %arg1[%c0, %c0_0] : memref<8x32xf32, #tpu.memory_space<vmem>>, vector<8x32xf32>
    %c0_1 = arith.constant 0 : index
    %c0_2 = arith.constant 0 : index
    %1 = vector.load %arg2[%c0_1, %c0_2] : memref<32x3xf32, #tpu.memory_space<vmem>>, vector<32x3xf32>
    %cst = arith.constant dense<0.000000e+00> : vector<8x3xf32>
    %2 = tpu.matmul %0, %1, %cst {dimension_numbers = #tpu.dot_dimension_numbers<[1], [0], [0], [1], [0, 0, 1, 1], [], []>} : vector<8x32xf32>, vector<32x3xf32>, vector<8x3xf32> -> vector<8x3xf32>
    %c0_3 = arith.constant 0 : index
    %c0_4 = arith.constant 0 : index
    %3 = vector.load %arg3[%c0_3, %c0_4] : memref<1x3xf32, #tpu.memory_space<vmem>>, vector<1x3xf32>
    %4 = vector.extract_strided_slice %2 {offsets = [0, 0], sizes = [8, 1], strides = [1, 1]} : vector<8x3xf32> to vector<8x1xf32>
    %cst_5 = arith.constant 1.000000e+00 : f32
    %5 = vector.broadcast %cst_5 : f32 to vector<8x1xf32>
    %6 = arith.addf %5, %4 : vector<8x1xf32>
    %7 = vector.extract_strided_slice %3 {offsets = [0, 0], sizes = [1, 1], strides = [1, 1]} : vector<1x3xf32> to vector<1x1xf32>
    %8 = vector.broadcast %7 : vector<1x1xf32> to vector<8x1xf32>
    %9 = arith.addf %6, %8 : vector<8x1xf32>
    %10 = vector.extract_strided_slice %2 {offsets = [0, 1], sizes = [8, 1], strides = [1, 1]} : vector<8x3xf32> to vector<8x1xf32>
    %cst_6 = arith.constant 1.000000e+00 : f32
    %11 = vector.broadcast %cst_6 : f32 to vector<8x1xf32>
    %12 = arith.addf %11, %10 : vector<8x1xf32>
    %13 = arith.mulf %9, %12 : vector<8x1xf32>
    %14 = vector.extract_strided_slice %3 {offsets = [0, 1], sizes = [1, 1], strides = [1, 1]} : vector<1x3xf32> to vector<1x1xf32>
    %15 = vector.broadcast %14 : vector<1x1xf32> to vector<8x1xf32>
    %16 = arith.addf %13, %15 : vector<8x1xf32>
    %17 = vector.extract_strided_slice %2 {offsets = [0, 2], sizes = [8, 1], strides = [1, 1]} : vector<8x3xf32> to vector<8x1xf32>
    %cst_7 = arith.constant 1.000000e+00 : f32
    %18 = vector.broadcast %cst_7 : f32 to vector<8x1xf32>
    %19 = arith.addf %18, %17 : vector<8x1xf32>
    %20 = arith.mulf %16, %19 : vector<8x1xf32>
    %21 = vector.extract_strided_slice %3 {offsets = [0, 2], sizes = [1, 1], strides = [1, 1]} : vector<1x3xf32> to vector<1x1xf32>
    %22 = vector.broadcast %21 : vector<1x1xf32> to vector<8x1xf32>
    %23 = arith.addf %20, %22 : vector<8x1xf32>
    %24 = vector.broadcast %23 : vector<8x1xf32> to vector<8x32xf32>
    %25 = arith.mulf %0, %24 : vector<8x32xf32>
    %c0_8 = arith.constant 0 : index
    %c0_9 = arith.constant 0 : index
    %26 = vector.load %arg4[%c0_8, %c0_9] : memref<1x32xf32, #tpu.memory_space<vmem>>, vector<1x32xf32>
    %27 = vector.broadcast %26 : vector<1x32xf32> to vector<8x32xf32>
    %28 = arith.addf %25, %27 : vector<8x32xf32>
    %c0_10 = arith.constant 0 : index
    %c0_11 = arith.constant 0 : index
    %29 = vector.load %arg5[%c0_10, %c0_11] : memref<8x32xf32, #tpu.memory_space<vmem>>, vector<8x32xf32>
    tpu.vector_store %arg5[%c0_10, %c0_11], %28 {strides = array<i32>} : memref<8x32xf32, #tpu.memory_space<vmem>>, vector<8x32xf32>,
    return
  }
  func.func @transform_0(%arg0: i32) -> (i32, i32) {
    %c0_i32 = arith.constant 0 : i32
    %c0_i32_0 = arith.constant 0 : i32
    return %arg0, %c0_i32 : i32, i32
  }
  func.func @transform_1(%arg0: i32) -> (i32, i32) {
    %c0_i32 = arith.constant 0 : i32
    %c0_i32_0 = arith.constant 0 : i32
    %c0_i32_1 = arith.constant 0 : i32
    return %c0_i32, %c0_i32_0 : i32, i32
  }
  func.func @transform_2(%arg0: i32) -> (i32, i32) {
    %c0_i32 = arith.constant 0 : i32
    %c0_i32_0 = arith.constant 0 : i32
    %c0_i32_1 = arith.constant 0 : i32
    return %c0_i32, %c0_i32_0 : i32, i32
  }
  func.func @transform_3(%arg0: i32) -> (i32, i32) {
    %c0_i32 = arith.constant 0 : i32
    %c0_i32_0 = arith.constant 0 : i32
    %c0_i32_1 = arith.constant 0 : i32
    return %c0_i32, %c0_i32_0 : i32, i32
  }
  func.func @transform_4(%arg0: i32) -> (i32, i32) {
    %c0_i32 = arith.constant 0 : i32
    %c0_i32_0 = arith.constant 0 : i32
    return %arg0, %c0_i32 : i32, i32
  }
}

</mosaic_0001>

<llo_original>
// kernel: tpu_custom_call.1
$region0: #{tpu_custom_call.1}
  #allocation0 [shape = 'u32[]', space=smem, size = 0x4, offset = 0x4, fixed_abs, tag = 'smem constant byte address 0x4 - core index']
  #allocation1 [shape = 'u32[144,128]{1,0:T(1,128)}', space=vmem, size = 0x12000, scoped, tag = 'internal scratch']
  %s0 = inlined_call_operand.vmem [shape: f32[8,32], index: 0, kind: input, shape index: {}]
  %s1 = inlined_call_operand.vmem [shape: f32[32,3], index: 1, kind: input, shape index: {}]
  %s2 = inlined_call_operand.vmem [shape: f32[1,3], index: 2, kind: input, shape index: {}]
  %s3 = inlined_call_operand.vmem [shape: f32[1,32], index: 3, kind: input, shape index: {}]
  %s4 = inlined_call_operand.hbm [shape: f32[8,32], index: 4, kind: output, shape index: {}]
  %s5 = sld [smem:[#allocation0]]
  $region26: #{tpu_custom_call.1} parent=0
    _
  %s7 = ssub.s32 1, %s5
  %s8 = scalar_select 0, %s7, %s5
  $region1: #{tpu_custom_call.1} parent=0
    #allocation2 [shape = 'u8[4096]{0}', space=vmem, size = 0x1000, scoped, tag = 'output window, operand 0, single buffered']
    #allocation3 [shape = 's32[1]{0}', space=sflag, size = 0x4, scoped, tag = 'scoped memory for tpu_custom_call.1']
    %9 = vsyncpa [#allocation3], 0
    // Predicated region
    $region2: #{tpu_custom_call.1} parent=1 // pred_check
      _
    $region3: #{tpu_custom_call.1} parent=1 // pred_check_branch
      %11 = sbr.rel (0) target = $region5
    $region4: #{tpu_custom_call.1} parent=1 // pred_region
      _
    $region5: #{tpu_custom_call.1} parent=1 // pred_fallthru
      _
    // Predicated region
    $region6: #{tpu_custom_call.1} parent=1 // pred_check
      _
    $region7: #{tpu_custom_call.1} parent=1 // pred_check_branch
      %13 = sbr.rel (0) target = $region9
    $region8: #{tpu_custom_call.1} parent=1 // pred_region
      _
    $region9: #{tpu_custom_call.1} parent=1 // pred_fallthru
      _
    // Predicated region
    $region10: #{tpu_custom_call.1} parent=1 // pred_check
      _
    $region11: #{tpu_custom_call.1} parent=1 // pred_check_branch
      %15 = sbr.rel (0) target = $region13
    $region12: #{tpu_custom_call.1} parent=1 // pred_region
      _
    $region13: #{tpu_custom_call.1} parent=1 // pred_fallthru
      _
    // Predicated region
    $region14: #{tpu_custom_call.1} parent=1 // pred_check
      _
    $region15: #{tpu_custom_call.1} parent=1 // pred_check_branch
      %17 = sbr.rel (0) target = $region17
    $region16: #{tpu_custom_call.1} parent=1 // pred_region
      _
    $region17: #{tpu_custom_call.1} parent=1 // pred_fallthru
      _
    %v18 = vld [vmem:[%s0] sm:$0xff]
    %v19 = vld [vmem:[%s1] sm:$0xff]
    %v20 = vld [vmem:[%s1 + $0x8] sm:$0xff]
    %v21 = vld [vmem:[%s1 + $0x10] sm:$0xff]
    %v22 = vld [vmem:[%s1 + $0x18] sm:$0xff]
    %vm23 = vcmask 261120
    %v25 = vsel %vm23, %v18, 0
    %27 = vmatprep.subr.mxu0 0.0
    %28 = vmatpush1.msra.mxu0 %v19
    %29 = vmatprep.subr.mxu0 0.0
    %30 = vmatpush1.msra.mxu0 %v20
    %31 = vmatprep.subr.mxu0 0.0
    %32 = vmatpush1.msra.mxu0 %v21
    %33 = vmatprep.subr.mxu0 0.0
    %34 = vmatpush1.msra.mxu0 %v22
    %35 = vmatprep.subr.mxu0 0.0
    %36 = vmatpush1.msra.mxu0 0.0
    %37 = vmatprep.subr.mxu0 0.0
    %38 = vmatpush1.msra.mxu0 0.0
    %39 = vmatprep.subr.mxu0 0.0
    %40 = vmatpush1.msra.mxu0 0.0
    %41 = vmatprep.subr.mxu0 0.0
    %42 = vmatpush1.msra.mxu0 0.0
    %43 = vmatprep.subr.mxu0 0.0
    %44 = vmatpush1.msra.mxu0 0.0
    %45 = vmatprep.subr.mxu0 0.0
    %46 = vmatpush1.msra.mxu0 0.0
    %47 = vmatprep.subr.mxu0 0.0
    %48 = vmatpush1.msra.mxu0 0.0
    %49 = vmatprep.subr.mxu0 0.0
    %50 = vmatpush1.msra.mxu0 0.0
    %51 = vmatprep.subr.mxu0 0.0
    %52 = vmatpush1.msra.mxu0 0.0
    %53 = vmatprep.subr.mxu0 0.0
    %54 = vmatpush1.msra.mxu0 0.0
    %55 = vmatprep.subr.mxu0 0.0
    %56 = vmatpush1.msra.mxu0 0.0
    %57 = vmatprep.subr.mxu0 0.0
    %58 = vmatpush1.msra.mxu0 0.0
    %59 = vmatprep.subr.mxu0 0.0
    %60 = vmatpush1.msra.mxu0 0.0
    %61 = vmatprep.subr.mxu0 0.0
    %62 = vmatpush1.msra.mxu0 0.0
    %63 = vmatprep.subr.mxu0 0.0
    %64 = vmatpush1.msra.mxu0 0.0
    %65 = vmatprep.subr.mxu0 0.0
    %66 = vmatpush1.msra.mxu0 0.0
    %67 = vmatprep.subr.mxu0 0.0
    %68 = vmatpush1.msra.mxu0 0.0
    %69 = vmatprep.subr.mxu0 0.0
    %70 = vmatpush1.msra.mxu0 0.0
    %71 = vmatprep.subr.mxu0 0.0
    %72 = vmatpush1.msra.mxu0 0.0
    %73 = vmatprep.subr.mxu0 0.0
    %74 = vmatpush1.msra.mxu0 0.0
    %75 = vmatprep.subr.mxu0 0.0
    %76 = vmatpush1.msra.mxu0 0.0
    %77 = vmatprep.subr.mxu0 0.0
    %78 = vmatpush1.msra.mxu0 0.0
    %79 = vmatprep.subr.mxu0 0.0
    %80 = vmatpush1.msra.mxu0 0.0
    %81 = vmatprep.subr.mxu0 0.0
    %82 = vmatpush1.msra.mxu0 0.0
    %83 = vmatprep.subr.mxu0 0.0
    %84 = vmatpush1.msra.mxu0 0.0
    %85 = vmatprep.subr.mxu0 0.0
    %86 = vmatpush1.msra.mxu0 0.0
    %87 = vmatprep.subr.mxu0 0.0
    %88 = vmatpush1.msra.mxu0 0.0
    %89 = vmatprep.subr.mxu0 0.0
    %90 = vmatpush1.msra.mxu0 0.0
    %91 = vmatprep.mubr.f32.mxu0 0.0
    %92 = vmatmul.mubr.f32.gmra.mrb[0].mxu0 %v25
    %v93 = vpop.f32.mrb[0].mxu0
    %v94 = vadd.f32 0.0, %v93
    %v95 = vpop.f32.mrb[0].mxu0
    %96 = vdwg.mxu0
    %v97 = vld [vmem:[%s2] sm:$0x1]
    %v98 = vadd.f32 %v94, 1.0
    %v100 = vlaneseq
    %v101 = vshrl.u32 %v100, 7
    %v102 = vsub.s32 0, %v101
    %v103 = vrot.slane %v97, %v102
    %v105 = vadd.f32 %v98, %v103
    %107 = vrot.lane.b32.xlu0 %v98, 127
    %v108 = vpop.permute.xlu0 %107
    %v110 = vmul.f32 %v105, %v108
    %111 = vrot.lane.b32.xlu0 %v103, 127
    %v112 = vpop.permute.xlu0 %111
    %v114 = vadd.f32 %v110, %v112
    %115 = vrot.lane.b32.xlu0 %v98, 126
    %v116 = vpop.permute.xlu0 %115
    %v118 = vmul.f32 %v114, %v116
    %119 = vrot.lane.b32.xlu0 %v103, 126
    %v120 = vpop.permute.xlu0 %119
    %v122 = vadd.f32 %v118, %v120
    %124 = vset.pattern.permute.xlu0 0
    %125 = vperm.xlu0 %124, %v122
    %v126 = vpop.permute.xlu0 %125
    %v128 = vmul.f32 %v18, %v126
    %v129 = vld [vmem:[%s3] sm:$0x1]
    %v131 = vlaneseq
    %v132 = vshrl.u32 %v131, 7
    %v133 = vsub.s32 0, %v132
    %v134 = vrot.slane %v129, %v133
    %v136 = vadd.f32 %v128, %v134
    %137 = vst.msk [vmem:[#allocation2] sm:$0xff] %vm23, %v136
    // Predicated region
    $region18: #{tpu_custom_call.1} parent=1 // pred_check
      _
    $region19: #{tpu_custom_call.1} parent=1 // pred_check_branch
      %139 = sbr.rel (0) target = $region21
    $region20: #{tpu_custom_call.1} parent=1 // pred_region
      %s141 = ssub.s32 128, 128
      %142 = vsyncadd [#allocation3], %s141
      %s144 = sshll.u32 [#allocation2], 4
      %s145 = int_to_ptr.vmem [resolvable:$true] %s144
      %147 = dma.vmem_to_hbm [thread:$0]  %s145, 128, %s4, [#allocation3]
    $region21: #{tpu_custom_call.1} parent=1 // pred_fallthru
      _
    // Predicated region
    $region22: #{tpu_custom_call.1} parent=1 // pred_check
      _
    $region23: #{tpu_custom_call.1} parent=1 // pred_check_branch
      %149 = sbr.rel (0) target = $region25
    $region24: #{tpu_custom_call.1} parent=1 // pred_region
      %150 = dma.done [#allocation3], 128
    $region25: #{tpu_custom_call.1} parent=1 // pred_fallthru
      _
    %151 = vsyncpa [#allocation3], 1

</llo_original>
